<compile_context>
chip_gen: v6e
topology: v6e:2x2x1
jax: 0.10.0
libtpu: 0.0.40
codegen_flags: <defaults>
</compile_context>

<pallas_src>
import functools

import jax
import jax.numpy as jnp
from jax.experimental import pallas as pl
from jax.experimental.pallas import tpu as pltpu


def _round_up(v: int, m: int) -> int:
    return -(-v // m) * m


def _layernorm_kernel(x_ref, alpha_ref, bias_ref, o_ref, *, eps: float, n: int):
    # x_ref: (tm, F); alpha_ref / bias_ref: (1, F) f32, resident across the grid.
    x = x_ref[...].astype(jnp.float32)

    # Pass 1: mean.
    mean = jnp.sum(x, axis=-1, keepdims=True) * (1.0 / float(n))
    d = x - mean

    # Pass 2: unbiased (N-1) variance, matching torch.Tensor.std's default.
    # n == 1 gives 0 * nan -> NaN, same as torch's unbiased std of one element.
    inv_nm1 = (1.0 / float(n - 1)) if n > 1 else float("nan")
    var = jnp.sum(d * d, axis=-1, keepdims=True) * inv_nm1
    std = jnp.sqrt(var)

    # Per-row exact reciprocal (tm, 1), then broadcast-multiply (VALU has slack).
    inv = pl.reciprocal(std + eps, approx=False)

    o_ref[...] = (d * inv * alpha_ref[...] + bias_ref[...]).astype(o_ref.dtype)


def _vmem_policy():
    """(tile budget bytes, vmem_limit_bytes) — generation aware."""
    cap = 128 << 20
    try:
        cap = pltpu.get_tpu_info().vmem_capacity_bytes
    except Exception:
        pass
    if cap <= (64 << 20):              # v7x-class: 64 MiB per TensorCore
        return 16 << 20, 32 << 20
    return 40 << 20, 64 << 20          # v5e / v6e: 128 MiB physical VMEM


def _choose_tile_rows(rows: int, feat: int, in_itemsize: int,
                      budget_bytes: int) -> int:
    """Row tile: dtype-aware VMEM budget, >= 8 grid steps when worthwhile,
    16-row aligned, never exceeding the row extent."""
    if rows <= 16:
        return rows                    # full-extent block (always legal)

    # Live VMEM per tile row: 2x double-buffered input + 2x output tiles in their
    # real dtype, plus ~2 f32 tiles the kernel materializes (x_f32 / centered d).
    per_row_bytes = feat * (4 * in_itemsize + 2 * 4)
    tm = max(16, budget_bytes // per_row_bytes)
    tm = min(tm, 1024)

    # Target >= 8 grid steps (>= 4 per v7x TensorCore) as long as each step still
    # moves >= ~2 MiB of HBM traffic (per-step overhead ~0.35 us).
    io_row_bytes = 2 * feat * in_itemsize
    min_rows = max(16, -(-(2 << 20) // io_row_bytes))
    tm = min(tm, max(min_rows, _round_up(-(-rows // 8), 16)))

    # 16-row alignment (clean bf16 sublane packing, satisfies the (8,128) rule);
    # keep the block within the row extent (the ragged LAST block is masked).
    tm = min(tm, rows)
    tm = max(16, (tm // 16) * 16)
    return tm


def layer_norm_pallas(x, alpha, bias, *, eps: float = 1e-6):
    """LayerNormalization over the last axis of x.

    x: (..., F);  alpha: (F,);  bias: (F,)
    """
    orig_shape = x.shape
    F = orig_shape[-1]
    x2 = x.reshape(-1, F)
    R = x2.shape[0]

    in_itemsize = jnp.dtype(x.dtype).itemsize
    budget_bytes, vmem_limit = _vmem_policy()
    tm = _choose_tile_rows(R, F, in_itemsize, budget_bytes)
    grid = (pl.cdiv(R, tm),)

    # Tiny one-time casts; keeps the per-step kernel body free of alpha/bias casts.
    alpha2 = alpha.reshape(1, F).astype(jnp.float32)
    bias2 = bias.reshape(1, F).astype(jnp.float32)

    kernel = functools.partial(_layernorm_kernel, eps=float(eps), n=F)

    out2 = pl.pallas_call(
        kernel,
        out_shape=jax.ShapeDtypeStruct((R, F), x.dtype),
        grid_spec=pltpu.PrefetchScalarGridSpec(
            num_scalar_prefetch=0,
            grid=grid,
            in_specs=[
                pl.BlockSpec((tm, F), lambda i: (i, 0)),   # x row tile
                pl.BlockSpec((1, F), lambda i: (0, 0)),    # alpha (resident)
                pl.BlockSpec((1, F), lambda i: (0, 0)),    # bias  (resident)
            ],
            out_specs=pl.BlockSpec((tm, F), lambda i: (i, 0)),
        ),
        compiler_params=pltpu.CompilerParams(
            dimension_semantics=("parallel",),
            vmem_limit_bytes=vmem_limit,
        ),
    )(x2, alpha2, bias2)

    return out2.reshape(orig_shape)


def layer_norm_reference(x, alpha, bias, eps=1e-6):
    x32 = x.astype(jnp.float32)
    mean = jnp.mean(x32, axis=-1, keepdims=True)
    n = x32.shape[-1]
    var = jnp.sum((x32 - mean) ** 2, axis=-1, keepdims=True) / (n - 1)
    std = jnp.sqrt(var)
    return (alpha * (x32 - mean) / (std + eps) + bias).astype(x.dtype)


if __name__ == "__main__":
    key = jax.random.PRNGKey(0)

    # Shapes implied by the module: (batch, seq, features) with F = `features`.
    batch, seq, features = 2, 8, 32
    x = jax.random.normal(key, (batch, seq, features), dtype=jnp.float32)

    # nn.Parameter(torch.ones(features)) / nn.Parameter(torch.zeros(features))
    alpha = jnp.ones((features,), dtype=jnp.float32)
    bias = jnp.zeros((features,), dtype=jnp.float32)

    out = layer_norm_pallas(x, alpha, bias, eps=1e-6)
    out = jax.block_until_ready(out)

    ref = layer_norm_reference(x, alpha, bias, eps=1e-6)
    assert out.shape == x.shape
    assert jnp.allclose(out, ref, atol=1e-5, rtol=1e-5), "mismatch vs reference"

    # Second small check: ragged row grid (R=40, tm=32) and F not a multiple of 128,
    # exercising the no-padding / masked-last-block path.
    k2 = jax.random.PRNGKey(1)
    F2 = 200
    x2 = jax.random.normal(k2, (5, 8, F2), dtype=jnp.float32) * 3.0 + 1.5
    a2 = jax.random.normal(jax.random.PRNGKey(2), (F2,), dtype=jnp.float32)
    b2 = jax.random.normal(jax.random.PRNGKey(3), (F2,), dtype=jnp.float32)
    out2 = jax.block_until_ready(layer_norm_pallas(x2, a2, b2, eps=1e-6))
    ref2 = layer_norm_reference(x2, a2, b2, eps=1e-6)
    assert jnp.allclose(out2, ref2, atol=1e-5, rtol=1e-5), "mismatch vs reference (ragged)"

    print("KERNEL_OK")
</pallas_src>

<mosaic_0001>
module attributes {stable_mosaic.version = 11 : i64} {
  func.func @_layernorm_kernel(%arg0: i32, %arg1: memref<16x32xf32, #tpu.memory_space<vmem>>, %arg2: memref<1x32xf32, #tpu.memory_space<vmem>>, %arg3: memref<1x32xf32, #tpu.memory_space<vmem>>, %arg4: memref<16x32xf32, #tpu.memory_space<vmem>>) attributes {dimension_semantics = [#tpu.dimension_semantics<parallel>], iteration_bounds = array<i64: 1>, scalar_prefetch = 0 : i64, scratch_operands = 0 : i64, tpu.core_type = #tpu.core_type<tc>, window_params = [{transform_indices = @transform_0, window_bounds = array<i64: 16, 32>}, {pipeline_mode = #tpu.pipeline_mode<synchronous>, transform_indices = @transform_1, window_bounds = array<i64: 1, 32>}, {pipeline_mode = #tpu.pipeline_mode<synchronous>, transform_indices = @transform_2, window_bounds = array<i64: 1, 32>}, {transform_indices = @transform_3, window_bounds = array<i64: 16, 32>}]} {
    %c0 = arith.constant 0 : index
    %c0_0 = arith.constant 0 : index
    %0 = vector.load %arg1[%c0, %c0_0] : memref<16x32xf32, #tpu.memory_space<vmem>>, vector<16x32xf32>
    %cst = arith.constant dense<0.000000e+00> : vector<16xf32>
    %1 = vector.multi_reduction <add>, %0, %cst [1] : vector<16x32xf32> to vector<16xf32>
    %2 = vector.shape_cast %1 : vector<16xf32> to vector<16x1xf32>
    %cst_1 = arith.constant 3.125000e-02 : f32
    %3 = vector.broadcast %cst_1 : f32 to vector<16x1xf32>
    %4 = arith.mulf %2, %3 : vector<16x1xf32>
    %5 = vector.broadcast %4 : vector<16x1xf32> to vector<16x32xf32>
    %6 = arith.subf %0, %5 : vector<16x32xf32>
    %7 = arith.mulf %6, %6 : vector<16x32xf32>
    %cst_2 = arith.constant dense<0.000000e+00> : vector<16xf32>
    %8 = vector.multi_reduction <add>, %7, %cst_2 [1] : vector<16x32xf32> to vector<16xf32>
    %9 = vector.shape_cast %8 : vector<16xf32> to vector<16x1xf32>
    %cst_3 = arith.constant 0.0322580636 : f32
    %10 = vector.broadcast %cst_3 : f32 to vector<16x1xf32>
    %11 = arith.mulf %9, %10 : vector<16x1xf32>
    %12 = math.sqrt %11 : vector<16x1xf32>
    %cst_4 = arith.constant 9.99999997E-7 : f32
    %13 = vector.broadcast %cst_4 : f32 to vector<16x1xf32>
    %14 = arith.addf %12, %13 : vector<16x1xf32>
    %15 = tpu.reciprocal %14 : vector<16x1xf32> -> vector<16x1xf32>
    %16 = vector.broadcast %15 : vector<16x1xf32> to vector<16x32xf32>
    %17 = arith.mulf %6, %16 : vector<16x32xf32>
    %c0_5 = arith.constant 0 : index
    %c0_6 = arith.constant 0 : index
    %18 = vector.load %arg2[%c0_5, %c0_6] : memref<1x32xf32, #tpu.memory_space<vmem>>, vector<1x32xf32>
    %19 = vector.broadcast %18 : vector<1x32xf32> to vector<16x32xf32>
    %20 = arith.mulf %17, %19 : vector<16x32xf32>
    %c0_7 = arith.constant 0 : index
    %c0_8 = arith.constant 0 : index
    %21 = vector.load %arg3[%c0_7, %c0_8] : memref<1x32xf32, #tpu.memory_space<vmem>>, vector<1x32xf32>
    %22 = vector.broadcast %21 : vector<1x32xf32> to vector<16x32xf32>
    %23 = arith.addf %20, %22 : vector<16x32xf32>
    %c0_9 = arith.constant 0 : index
    %c0_10 = arith.constant 0 : index
    %24 = vector.load %arg4[%c0_9, %c0_10] : memref<16x32xf32, #tpu.memory_space<vmem>>, vector<16x32xf32>
    tpu.vector_store %arg4[%c0_9, %c0_10], %23 {strides = array<i32>} : memref<16x32xf32, #tpu.memory_space<vmem>>, vector<16x32xf32>,
    return
  }
  func.func @transform_0(%arg0: i32) -> (i32, i32) {
    %c0_i32 = arith.constant 0 : i32
    %c0_i32_0 = arith.constant 0 : i32
    return %arg0, %c0_i32 : i32, i32
  }
  func.func @transform_1(%arg0: i32) -> (i32, i32) {
    %c0_i32 = arith.constant 0 : i32
    %c0_i32_0 = arith.constant 0 : i32
    %c0_i32_1 = arith.constant 0 : i32
    return %c0_i32, %c0_i32_0 : i32, i32
  }
  func.func @transform_2(%arg0: i32) -> (i32, i32) {
    %c0_i32 = arith.constant 0 : i32
    %c0_i32_0 = arith.constant 0 : i32
    %c0_i32_1 = arith.constant 0 : i32
    return %c0_i32, %c0_i32_0 : i32, i32
  }
  func.func @transform_3(%arg0: i32) -> (i32, i32) {
    %c0_i32 = arith.constant 0 : i32
    %c0_i32_0 = arith.constant 0 : i32
    return %arg0, %c0_i32 : i32, i32
  }
}

</mosaic_0001>

<llo_original>
// kernel: tpu_custom_call.1
$region0: #{tpu_custom_call.1}
  #allocation0 [shape = 'u32[]', space=smem, size = 0x4, offset = 0x4, fixed_abs, tag = 'smem constant byte address 0x4 - core index']
  #allocation1 [shape = 'u32[144,128]{1,0:T(1,128)}', space=vmem, size = 0x12000, scoped, tag = 'internal scratch']
  %s0 = inlined_call_operand.hbm [shape: f32[16,32], index: 0, kind: input, shape index: {}]
  %s1 = inlined_call_operand.vmem [shape: f32[1,32], index: 1, kind: input, shape index: {}]
  %s2 = inlined_call_operand.vmem [shape: f32[1,32], index: 2, kind: input, shape index: {}]
  %s3 = inlined_call_operand.hbm [shape: f32[16,32], index: 3, kind: output, shape index: {}]
  %s4 = sld [smem:[#allocation0]]
  $region26: #{tpu_custom_call.1} parent=0
    _
  %s6 = ssub.s32 1, %s4
  %s7 = scalar_select 0, %s6, %s4
  $region1: #{tpu_custom_call.1} parent=0
    #allocation2 [shape = 'u8[8192]{0}', space=vmem, size = 0x2000, scoped, tag = 'input window, operand 0, single buffered']
    #allocation3 [shape = 's32[1]{0}', space=sflag, size = 0x4, scoped, tag = 'scoped memory for tpu_custom_call.1']
    #allocation4 [shape = 's32[1]{0}', space=sflag, size = 0x4, scoped, tag = 'scoped memory for tpu_custom_call.1']
    #allocation5 [shape = 'u8[8192]{0}', space=vmem, size = 0x2000, scoped, tag = 'output window, operand 0, single buffered']
    %8 = vsyncpa [#allocation3], 0
    %9 = vsyncpa [#allocation4], 0
    // Predicated region
    $region2: #{tpu_custom_call.1} parent=1 // pred_check
      _
    $region3: #{tpu_custom_call.1} parent=1 // pred_check_branch
      %11 = sbr.rel (0) target = $region5
    $region4: #{tpu_custom_call.1} parent=1 // pred_region
      %s13 = ssub.s32 256, 256
      %14 = vsyncadd [#allocation3], %s13
      %s15 = sshll.u32 [#allocation2], 4
      %s16 = int_to_ptr.vmem [resolvable:$true] %s15
      %21 = dma.hbm_to_vmem [thread:$0]  %s0, 256, %s16, [#allocation3], 128, 128, 8
    $region5: #{tpu_custom_call.1} parent=1 // pred_fallthru
      _
    // Predicated region
    $region6: #{tpu_custom_call.1} parent=1 // pred_check
      _
    $region7: #{tpu_custom_call.1} parent=1 // pred_check_branch
      %23 = sbr.rel (0) target = $region9
    $region8: #{tpu_custom_call.1} parent=1 // pred_region
      _
    $region9: #{tpu_custom_call.1} parent=1 // pred_fallthru
      _
    // Predicated region
    $region10: #{tpu_custom_call.1} parent=1 // pred_check
      _
    $region11: #{tpu_custom_call.1} parent=1 // pred_check_branch
      %25 = sbr.rel (0) target = $region13
    $region12: #{tpu_custom_call.1} parent=1 // pred_region
      _
    $region13: #{tpu_custom_call.1} parent=1 // pred_fallthru
      _
    // Predicated region
    $region14: #{tpu_custom_call.1} parent=1 // pred_check
      _
    $region15: #{tpu_custom_call.1} parent=1 // pred_check_branch
      %27 = sbr.rel (0) target = $region17
    $region16: #{tpu_custom_call.1} parent=1 // pred_region
      %28 = dma.done [#allocation3], 256
    $region17: #{tpu_custom_call.1} parent=1 // pred_fallthru
      _
    %v29 = vld [vmem:[#allocation2] sm:$0xff]
    %v30 = vld [vmem:[#allocation2 + $0x8] sm:$0xff]
    %vm31 = vcmask 261120
    %v32 = vsel %vm31, %v29, 0.0
    %33 = vadd.xlane.f32.xlu0 %v32
    %v34 = vpop.xlane.xlu0 %33
    %v35 = vsel %vm31, %v30, 0.0
    %36 = vadd.xlane.f32.xlu0 %v35
    %v37 = vpop.xlane.xlu0 %36
    %v38 = vmul.f32 %v34, 0.03125
    %v39 = vmul.f32 %v37, 0.03125
    %v40 = vsub.f32 %v29, %v38
    %v41 = vsub.f32 %v30, %v39
    %v42 = vmul.f32 %v40, %v40
    %v43 = vmul.f32 %v41, %v41
    %v44 = vsel %vm31, %v42, 0.0
    %45 = vadd.xlane.f32.xlu0 %v44
    %v46 = vpop.xlane.xlu0 %45
    %v47 = vsel %vm31, %v43, 0.0
    %48 = vadd.xlane.f32.xlu0 %v47
    %v49 = vpop.xlane.xlu0 %48
    %v50 = vmul.f32 %v46, 0.032258064
    %v51 = vmul.f32 %v49, 0.032258064
    %v52 = vrsqrt.pop %v50
    %v53 = vmul.f32 %v50, %v52
    %vm54 = vcmp.eq.f32.partialorder %v50, inf
    %v55 = vsel %vm54, %v50, %v53
    %vm56 = vcmp.eq.f32.partialorder %v50, 0.0
    %v57 = vand.u32 %v50, 2147483648
    %v58 = vsel %vm56, %v57, %v55
    %v59 = vrsqrt.pop %v51
    %v60 = vmul.f32 %v51, %v59
    %vm61 = vcmp.eq.f32.partialorder %v51, inf
    %v62 = vsel %vm61, %v51, %v60
    %vm63 = vcmp.eq.f32.partialorder %v51, 0.0
    %v64 = vand.u32 %v51, 2147483648
    %v65 = vsel %vm63, %v64, %v62
    %v66 = vadd.f32 %v58, 1e-06
    %v67 = vadd.f32 %v65, 1e-06
    %v68 = vrcp.pop %v66
    %v69 = vrcp.pop %v67
    %v70 = vmul.f32 %v40, %v68
    %v71 = vmul.f32 %v41, %v69
    %v72 = vld [vmem:[%s1] sm:$0x1]
    %v74 = vlaneseq
    %v75 = vshrl.u32 %v74, 7
    %v76 = vsub.s32 0, %v75
    %v77 = vrot.slane %v72, %v76
    %v79 = vmul.f32 %v70, %v77
    %v80 = vmul.f32 %v71, %v77
    %v81 = vld [vmem:[%s2] sm:$0x1]
    %v83 = vlaneseq
    %v84 = vshrl.u32 %v83, 7
    %v85 = vsub.s32 0, %v84
    %v86 = vrot.slane %v81, %v85
    %v88 = vadd.f32 %v79, %v86
    %v89 = vadd.f32 %v80, %v86
    %90 = vst.msk [vmem:[#allocation5] sm:$0xff] %vm31, %v88
    %91 = vst.msk [vmem:[#allocation5 + $0x8] sm:$0xff] %vm31, %v89
    // Predicated region
    $region18: #{tpu_custom_call.1} parent=1 // pred_check
      _
    $region19: #{tpu_custom_call.1} parent=1 // pred_check_branch
      %93 = sbr.rel (0) target = $region21
    $region20: #{tpu_custom_call.1} parent=1 // pred_region
      %s95 = ssub.s32 256, 256
      %96 = vsyncadd [#allocation4], %s95
      %s97 = sshll.u32 [#allocation5], 4
      %s98 = int_to_ptr.vmem [resolvable:$true] %s97
      %103 = dma.vmem_to_hbm [thread:$0]  %s98, 256, %s3, [#allocation4], 128, 128, 8
    $region21: #{tpu_custom_call.1} parent=1 // pred_fallthru
      _
    // Predicated region
    $region22: #{tpu_custom_call.1} parent=1 // pred_check
      _
    $region23: #{tpu_custom_call.1} parent=1 // pred_check_branch
      %105 = sbr.rel (0) target = $region25
    $region24: #{tpu_custom_call.1} parent=1 // pred_region
      %106 = dma.done [#allocation4], 256
    $region25: #{tpu_custom_call.1} parent=1 // pred_fallthru
      _
    %107 = vsyncpa [#allocation3], 1
    %108 = vsyncpa [#allocation4], 1

</llo_original>
